<compile_context>
chip_gen: v7x
topology: tpu7x:2x2x1
jax: 0.10.0
libtpu: 0.0.40
codegen_flags: <defaults>
</compile_context>

<pallas_src>
import functools

import jax
import jax.numpy as jnp
from jax import lax
from jax.experimental import pallas as pl
from jax.experimental.pallas import tpu as pltpu

VOCAB = 1000
EMBED = 32
SEQ = 50                  # 50 * 32 = 1600 = in_features of the first Linear
D_IN = SEQ * EMBED        # 1600
HIDDEN = 256
N_CLASSES = 10
PAD_OUT = 128             # lane-dense classifier width (columns >= 10 are masked)


def _net_kernel(x_ref, w1_ref, b1_ref, w2_ref, b2_ref, o_ref):
    """Fused Linear(1600,256) -> Linear(256,128pad) -> softmax on one batch tile.

    Dropout layers are identity at inference time and are omitted.
    """
    # dense: (tb, 1600) x (1600, 256); bf16 inputs, f32 accumulation.
    h = jnp.dot(x_ref[...], w1_ref[...],
                preferred_element_type=jnp.float32) + b1_ref[...]

    # dense1: (tb, 256) x (256, 128-padded).
    logits = jnp.dot(h.astype(jnp.bfloat16), w2_ref[...],
                     preferred_element_type=jnp.float32) + b2_ref[...]

    # Mask padded classifier columns, then numerically-stable softmax.
    col = lax.broadcasted_iota(jnp.int32, logits.shape, 1)
    logits = jnp.where(col < N_CLASSES, logits, -1e30)
    m = jnp.max(logits, axis=-1, keepdims=True)
    e = jnp.exp(logits - m)
    denom = jnp.sum(e, axis=-1, keepdims=True)
    o_ref[...] = e * pl.reciprocal(denom, approx=True)


def prepare_params(emb_table, w1, b1, w2, b2):
    """One-time weight preprocessing (bf16 casts + lane padding).

    Hoisted out of the per-call forward so ~1 MiB of weight casts/pads is not
    re-materialized on every step.
    """
    table_b = jnp.asarray(emb_table, jnp.bfloat16)
    w1_b = jnp.asarray(w1, jnp.bfloat16)
    w2_p = jnp.zeros((HIDDEN, PAD_OUT), jnp.bfloat16).at[:, :N_CLASSES].set(
        jnp.asarray(w2, jnp.bfloat16))
    b1_2d = jnp.asarray(b1, jnp.float32).reshape(1, HIDDEN)
    b2_p = jnp.zeros((1, PAD_OUT), jnp.float32).at[:, :N_CLASSES].set(
        jnp.asarray(b2, jnp.float32).reshape(1, N_CLASSES))
    return table_b, w1_b, b1_2d, w2_p, b2_p


def _pick_tb(B, tb_max):
    """Batch tile: multiple of 8, <= tb_max, and >= 2 grid steps when the batch
    is large enough (v7x has 2 TensorCores; a 1-step grid leaves one idle)."""
    b8 = ((B + 7) // 8) * 8
    if B <= 8:
        return 8
    if b8 > tb_max:
        return tb_max
    # Batch fits within tb_max rows: split into two tiles for v7x megacore.
    half8 = ((-(-B // 2) + 7) // 8) * 8
    return min(half8, tb_max)


@functools.partial(jax.jit, static_argnames=("tb_max",))
def net_forward(tokens, table_b, w1_b, b1_2d, w2_p, b2_p, *, tb_max=128):
    """tokens: (B, SEQ) int32 in [0, VOCAB). Returns (B, 10) f32 softmax probs.

    tb_max=128 fully occupies the v5e MXU's 128 rows; on v6e/v7x it may be
    raised to 256 (full M occupancy) -- VMEM residency stays ~3 MiB.
    """
    B = tokens.shape[0]
    tb = _pick_tb(B, tb_max)
    nb = -(-B // tb)
    b_pad = nb * tb
    if b_pad != B:
        tokens = jnp.pad(tokens, ((0, b_pad - B), (0, 0)))   # pad with token id 0

    # Embedding gather + flatten done by XLA inside this jit.  A true gather
    # moves O(B*50*32) elements; the previous in-kernel one-hot formulation was
    # ~4x the FLOPs of Linear(1600,256) at 32-wide MXU lanes.
    x = jnp.take(table_b, tokens, axis=0).reshape(b_pad, D_IN)   # bf16 (b_pad, 1600)

    out = pl.pallas_call(
        _net_kernel,
        out_shape=jax.ShapeDtypeStruct((b_pad, PAD_OUT), jnp.float32),
        grid=(nb,),
        in_specs=[
            pl.BlockSpec((tb, D_IN), lambda i: (i, 0)),          # x, tiled over batch
            pl.BlockSpec((D_IN, HIDDEN), lambda i: (0, 0)),      # w1 (VMEM-resident)
            pl.BlockSpec((1, HIDDEN), lambda i: (0, 0)),         # b1
            pl.BlockSpec((HIDDEN, PAD_OUT), lambda i: (0, 0)),   # w2 (lane-padded)
            pl.BlockSpec((1, PAD_OUT), lambda i: (0, 0)),        # b2 (lane-padded)
        ],
        out_specs=pl.BlockSpec((tb, PAD_OUT), lambda i: (i, 0)),
        compiler_params=pltpu.CompilerParams(
            dimension_semantics=("parallel",)),
    )(x, w1_b, b1_2d, w2_p, b2_p)

    return out[:B, :N_CLASSES]


def init_params(key):
    k_emb, k_w1, k_b1, k_w2, k_b2 = jax.random.split(key, 5)
    emb_table = jax.random.normal(k_emb, (VOCAB, EMBED), jnp.float32)
    lim1 = 1.0 / jnp.sqrt(D_IN)
    w1 = jax.random.uniform(k_w1, (D_IN, HIDDEN), jnp.float32, -lim1, lim1)
    b1 = jax.random.uniform(k_b1, (HIDDEN,), jnp.float32, -lim1, lim1)
    lim2 = 1.0 / jnp.sqrt(HIDDEN)
    w2 = jax.random.uniform(k_w2, (HIDDEN, N_CLASSES), jnp.float32, -lim2, lim2)
    b2 = jax.random.uniform(k_b2, (N_CLASSES,), jnp.float32, -lim2, lim2)
    return emb_table, w1, b1, w2, b2


if __name__ == "__main__":
    key = jax.random.PRNGKey(0)
    k_tok, k_params = jax.random.split(key)

    B = 2
    tokens = jax.random.randint(k_tok, (B, SEQ), 0, VOCAB, dtype=jnp.int32)
    emb_table, w1, b1, w2, b2 = init_params(k_params)

    params = prepare_params(emb_table, w1, b1, w2, b2)   # one-time preprocessing
    params = jax.block_until_ready(params)

    probs = net_forward(tokens, *params)
    probs = jax.block_until_ready(probs)

    # Pure-JAX reference mirroring the kernel's bf16 quantization of the weights.
    table_f = emb_table.astype(jnp.bfloat16).astype(jnp.float32)
    w1_f = w1.astype(jnp.bfloat16).astype(jnp.float32)
    w2_f = w2.astype(jnp.bfloat16).astype(jnp.float32)
    x_f = jnp.take(table_f, tokens, axis=0).reshape(B, D_IN)
    h_ref = x_f @ w1_f + b1
    logits_ref = h_ref.astype(jnp.bfloat16).astype(jnp.float32) @ w2_f + b2
    ref = jax.nn.softmax(logits_ref, axis=-1)

    assert probs.shape == (B, N_CLASSES)
    assert bool(jnp.allclose(jnp.sum(probs, axis=-1), 1.0, atol=1e-2))
    assert bool(jnp.allclose(probs, ref, atol=1e-2, rtol=1e-2))

    print("KERNEL_OK")
</pallas_src>

<mosaic_0001>
module attributes {stable_mosaic.version = 11 : i64} {
  func.func @_net_kernel(%arg0: i32, %arg1: memref<8x1600xbf16, #tpu.memory_space<vmem>>, %arg2: memref<1600x256xbf16, #tpu.memory_space<vmem>>, %arg3: memref<1x256xf32, #tpu.memory_space<vmem>>, %arg4: memref<256x128xbf16, #tpu.memory_space<vmem>>, %arg5: memref<1x128xf32, #tpu.memory_space<vmem>>, %arg6: memref<8x128xf32, #tpu.memory_space<vmem>>) attributes {dimension_semantics = [#tpu.dimension_semantics<parallel>], iteration_bounds = array<i64: 1>, scalar_prefetch = 0 : i64, scratch_operands = 0 : i64, tpu.core_type = #tpu.core_type<tc>, window_params = [{transform_indices = @transform_0, window_bounds = array<i64: 8, 1600>}, {pipeline_mode = #tpu.pipeline_mode<synchronous>, transform_indices = @transform_1, window_bounds = array<i64: 1600, 256>}, {pipeline_mode = #tpu.pipeline_mode<synchronous>, transform_indices = @transform_2, window_bounds = array<i64: 1, 256>}, {pipeline_mode = #tpu.pipeline_mode<synchronous>, transform_indices = @transform_3, window_bounds = array<i64: 256, 128>}, {pipeline_mode = #tpu.pipeline_mode<synchronous>, transform_indices = @transform_4, window_bounds = array<i64: 1, 128>}, {transform_indices = @transform_5, window_bounds = array<i64: 8, 128>}]} {
    %c0 = arith.constant 0 : index
    %c0_0 = arith.constant 0 : index
    %0 = vector.load %arg1[%c0, %c0_0] : memref<8x1600xbf16, #tpu.memory_space<vmem>>, vector<8x1600xbf16>
    %c0_1 = arith.constant 0 : index
    %c0_2 = arith.constant 0 : index
    %1 = vector.load %arg2[%c0_1, %c0_2] : memref<1600x256xbf16, #tpu.memory_space<vmem>>, vector<1600x256xbf16>
    %cst = arith.constant dense<0.000000e+00> : vector<8x256xf32>
    %2 = tpu.matmul %0, %1, %cst {dimension_numbers = #tpu.dot_dimension_numbers<[1], [0], [0], [1], [0, 0, 1, 1], [], []>} : vector<8x1600xbf16>, vector<1600x256xbf16>, vector<8x256xf32> -> vector<8x256xf32>
    %c0_3 = arith.constant 0 : index
    %c0_4 = arith.constant 0 : index
    %3 = vector.load %arg3[%c0_3, %c0_4] : memref<1x256xf32, #tpu.memory_space<vmem>>, vector<1x256xf32>
    %4 = vector.broadcast %3 : vector<1x256xf32> to vector<8x256xf32>
    %5 = arith.addf %2, %4 : vector<8x256xf32>
    %6 = arith.truncf %5 : vector<8x256xf32> to vector<8x256xbf16>
    %c0_5 = arith.constant 0 : index
    %c0_6 = arith.constant 0 : index
    %7 = vector.load %arg4[%c0_5, %c0_6] : memref<256x128xbf16, #tpu.memory_space<vmem>>, vector<256x128xbf16>
    %cst_7 = arith.constant dense<0.000000e+00> : vector<8x128xf32>
    %8 = tpu.matmul %6, %7, %cst_7 {dimension_numbers = #tpu.dot_dimension_numbers<[1], [0], [0], [1], [0, 0, 1, 1], [], []>} : vector<8x256xbf16>, vector<256x128xbf16>, vector<8x128xf32> -> vector<8x128xf32>
    %c0_8 = arith.constant 0 : index
    %c0_9 = arith.constant 0 : index
    %9 = vector.load %arg5[%c0_8, %c0_9] : memref<1x128xf32, #tpu.memory_space<vmem>>, vector<1x128xf32>
    %10 = vector.broadcast %9 : vector<1x128xf32> to vector<8x128xf32>
    %11 = arith.addf %8, %10 : vector<8x128xf32>
    %12 = tpu.iota {dimensions = array<i32: 1>} : vector<8x128xi32>
    %c10_i32 = arith.constant 10 : i32
    %13 = vector.broadcast %c10_i32 : i32 to vector<8x128xi32>
    %14 = arith.cmpi slt, %12, %13 : vector<8x128xi32>
    %cst_10 = arith.constant -1.000000e+30 : f32
    %15 = vector.broadcast %cst_10 : f32 to vector<8x128xf32>
    %16 = arith.select %14, %11, %15 : vector<8x128xi1>, vector<8x128xf32>
    %cst_11 = arith.constant dense<0xFF800000> : vector<8xf32>
    %17 = vector.multi_reduction <maximumf>, %16, %cst_11 [1] : vector<8x128xf32> to vector<8xf32>
    %18 = vector.shape_cast %17 : vector<8xf32> to vector<8x1xf32>
    %19 = vector.broadcast %18 : vector<8x1xf32> to vector<8x128xf32>
    %20 = arith.subf %16, %19 : vector<8x128xf32>
    %21 = math.exp %20 : vector<8x128xf32>
    %cst_12 = arith.constant dense<0.000000e+00> : vector<8xf32>
    %22 = vector.multi_reduction <add>, %21, %cst_12 [1] : vector<8x128xf32> to vector<8xf32>
    %23 = vector.shape_cast %22 : vector<8xf32> to vector<8x1xf32>
    %24 = tpu.reciprocal %23 {approx = true} : vector<8x1xf32> -> vector<8x1xf32>
    %25 = vector.broadcast %24 : vector<8x1xf32> to vector<8x128xf32>
    %26 = arith.mulf %21, %25 : vector<8x128xf32>
    %c0_13 = arith.constant 0 : index
    %c0_14 = arith.constant 0 : index
    %27 = vector.load %arg6[%c0_13, %c0_14] : memref<8x128xf32, #tpu.memory_space<vmem>>, vector<8x128xf32>
    tpu.vector_store %arg6[%c0_13, %c0_14], %26 {strides = array<i32>} : memref<8x128xf32, #tpu.memory_space<vmem>>, vector<8x128xf32>,
    return
  }
  func.func @transform_0(%arg0: i32) -> (i32, i32) {
    %c0_i32 = arith.constant 0 : i32
    %c0_i32_0 = arith.constant 0 : i32
    return %arg0, %c0_i32 : i32, i32
  }
  func.func @transform_1(%arg0: i32) -> (i32, i32) {
    %c0_i32 = arith.constant 0 : i32
    %c0_i32_0 = arith.constant 0 : i32
    %c0_i32_1 = arith.constant 0 : i32
    return %c0_i32, %c0_i32_0 : i32, i32
  }
  func.func @transform_2(%arg0: i32) -> (i32, i32) {
    %c0_i32 = arith.constant 0 : i32
    %c0_i32_0 = arith.constant 0 : i32
    %c0_i32_1 = arith.constant 0 : i32
    return %c0_i32, %c0_i32_0 : i32, i32
  }
  func.func @transform_3(%arg0: i32) -> (i32, i32) {
    %c0_i32 = arith.constant 0 : i32
    %c0_i32_0 = arith.constant 0 : i32
    %c0_i32_1 = arith.constant 0 : i32
    return %c0_i32, %c0_i32_0 : i32, i32
  }
  func.func @transform_4(%arg0: i32) -> (i32, i32) {
    %c0_i32 = arith.constant 0 : i32
    %c0_i32_0 = arith.constant 0 : i32
    %c0_i32_1 = arith.constant 0 : i32
    return %c0_i32, %c0_i32_0 : i32, i32
  }
  func.func @transform_5(%arg0: i32) -> (i32, i32) {
    %c0_i32 = arith.constant 0 : i32
    %c0_i32_0 = arith.constant 0 : i32
    return %arg0, %c0_i32 : i32, i32
  }
}

</mosaic_0001>

<llo_original>
// kernel: net_forward.1
$region0: #{net_forward.1}
  #allocation0 [shape = 'u32[]', space=smem, size = 0x4, offset = 0x4, fixed_abs, tag = 'smem constant byte address 0x4 - core index']
  #allocation1 [shape = 'u32[144,128]{1,0:T(1,128)}', space=vmem, size = 0x12000, scoped, tag = 'internal scratch']
  %s0 = inlined_call_operand.vmem [shape: bf16[8,1600], index: 0, kind: input, shape index: {}]
  %s1 = inlined_call_operand.vmem [shape: bf16[1600,256], index: 1, kind: input, shape index: {}]
  %s2 = inlined_call_operand.vmem [shape: f32[1,256], index: 2, kind: input, shape index: {}]
  %s3 = inlined_call_operand.vmem [shape: bf16[256,128], index: 3, kind: input, shape index: {}]
  %s4 = inlined_call_operand.vmem [shape: f32[1,128], index: 4, kind: input, shape index: {}]
  %s5 = inlined_call_operand.vmem [shape: f32[8,128], index: 5, kind: output, shape index: {}]
  %s6 = sld [smem:[#allocation0]]
  $region30: #{net_forward.1} parent=0
    _
  %s8 = ssub.s32 1, %s6
  %s9 = scalar_select 0, %s8, %s6
  // Predicated region
  $region2: #{net_forward.1} parent=0 // pred_check
    _
  $region3: #{net_forward.1} parent=0 // pred_check_branch
    %11 = sbr.rel (0) target = $region5
  $region4: #{net_forward.1} parent=0 // pred_region
    _
  $region5: #{net_forward.1} parent=0 // pred_fallthru
    _
  // Predicated region
  $region6: #{net_forward.1} parent=0 // pred_check
    _
  $region7: #{net_forward.1} parent=0 // pred_check_branch
    %13 = sbr.rel (0) target = $region9
  $region8: #{net_forward.1} parent=0 // pred_region
    _
  $region9: #{net_forward.1} parent=0 // pred_fallthru
    _
  // Predicated region
  $region10: #{net_forward.1} parent=0 // pred_check
    _
  $region11: #{net_forward.1} parent=0 // pred_check_branch
    %15 = sbr.rel (0) target = $region13
  $region12: #{net_forward.1} parent=0 // pred_region
    _
  $region13: #{net_forward.1} parent=0 // pred_fallthru
    _
  // Predicated region
  $region14: #{net_forward.1} parent=0 // pred_check
    _
  $region15: #{net_forward.1} parent=0 // pred_check_branch
    %17 = sbr.rel (0) target = $region17
  $region16: #{net_forward.1} parent=0 // pred_region
    _
  $region17: #{net_forward.1} parent=0 // pred_fallthru
    _
  // Predicated region
  $region18: #{net_forward.1} parent=0 // pred_check
    _
  $region19: #{net_forward.1} parent=0 // pred_check_branch
    %19 = sbr.rel (0) target = $region21
  $region20: #{net_forward.1} parent=0 // pred_region
    _
  $region21: #{net_forward.1} parent=0 // pred_fallthru
    _
  %v21 = vld [vmem:[%s0] sm:$0xff]
  %v22 = vld [vmem:[%s0 + $0x8] sm:$0xff]
  %v23 = vld [vmem:[%s0 + $0x10] sm:$0xff]
  %v24 = vld [vmem:[%s0 + $0x18] sm:$0xff]
  %v25 = vld [vmem:[%s0 + $0x20] sm:$0xff]
  %v26 = vld [vmem:[%s0 + $0x28] sm:$0xff]
  %v27 = vld [vmem:[%s0 + $0x30] sm:$0xf]
  %v28 = vld [vmem:[%s1] sm:$0xff]
  %v29 = vld [vmem:[%s1 + $0x8] sm:$0xff]
  %v30 = vld [vmem:[%s1 + $0x10] sm:$0xff]
  %v31 = vld [vmem:[%s1 + $0x18] sm:$0xff]
  %v32 = vld [vmem:[%s1 + $0x20] sm:$0xff]
  %v33 = vld [vmem:[%s1 + $0x28] sm:$0xff]
  %v34 = vld [vmem:[%s1 + $0x30] sm:$0xff]
  %v35 = vld [vmem:[%s1 + $0x38] sm:$0xff]
  %v36 = vld [vmem:[%s1 + $0x40] sm:$0xff]
  %v37 = vld [vmem:[%s1 + $0x48] sm:$0xff]
  %v38 = vld [vmem:[%s1 + $0x50] sm:$0xff]
  %v39 = vld [vmem:[%s1 + $0x58] sm:$0xff]
  %v40 = vld [vmem:[%s1 + $0x60] sm:$0xff]
  %v41 = vld [vmem:[%s1 + $0x68] sm:$0xff]
  %v42 = vld [vmem:[%s1 + $0x70] sm:$0xff]
  %v43 = vld [vmem:[%s1 + $0x78] sm:$0xff]
  %v44 = vld [vmem:[%s1 + $0x80] sm:$0xff]
  %v45 = vld [vmem:[%s1 + $0x88] sm:$0xff]
  %v46 = vld [vmem:[%s1 + $0x90] sm:$0xff]
  %v47 = vld [vmem:[%s1 + $0x98] sm:$0xff]
  %v48 = vld [vmem:[%s1 + $0xa0] sm:$0xff]
  %v49 = vld [vmem:[%s1 + $0xa8] sm:$0xff]
  %v50 = vld [vmem:[%s1 + $0xb0] sm:$0xff]
  %v51 = vld [vmem:[%s1 + $0xb8] sm:$0xff]
  %v52 = vld [vmem:[%s1 + $0xc0] sm:$0xff]
  %v53 = vld [vmem:[%s1 + $0xc8] sm:$0xff]
  %v54 = vld [vmem:[%s1 + $0xd0] sm:$0xff]
  %v55 = vld [vmem:[%s1 + $0xd8] sm:$0xff]
  %v56 = vld [vmem:[%s1 + $0xe0] sm:$0xff]
  %v57 = vld [vmem:[%s1 + $0xe8] sm:$0xff]
  %v58 = vld [vmem:[%s1 + $0xf0] sm:$0xff]
  %v59 = vld [vmem:[%s1 + $0xf8] sm:$0xff]
  %v60 = vld [vmem:[%s1 + $0x100] sm:$0xff]
  %v61 = vld [vmem:[%s1 + $0x108] sm:$0xff]
  %v62 = vld [vmem:[%s1 + $0x110] sm:$0xff]
  %v63 = vld [vmem:[%s1 + $0x118] sm:$0xff]
  %v64 = vld [vmem:[%s1 + $0x120] sm:$0xff]
  %v65 = vld [vmem:[%s1 + $0x128] sm:$0xff]
  %v66 = vld [vmem:[%s1 + $0x130] sm:$0xff]
  %v67 = vld [vmem:[%s1 + $0x138] sm:$0xff]
  %v68 = vld [vmem:[%s1 + $0x140] sm:$0xff]
  %v69 = vld [vmem:[%s1 + $0x148] sm:$0xff]
  %v70 = vld [vmem:[%s1 + $0x150] sm:$0xff]
  %v71 = vld [vmem:[%s1 + $0x158] sm:$0xff]
  %v72 = vld [vmem:[%s1 + $0x160] sm:$0xff]
  %v73 = vld [vmem:[%s1 + $0x168] sm:$0xff]
  %v74 = vld [vmem:[%s1 + $0x170] sm:$0xff]
  %v75 = vld [vmem:[%s1 + $0x178] sm:$0xff]
  %v76 = vld [vmem:[%s1 + $0x180] sm:$0xff]
  %v77 = vld [vmem:[%s1 + $0x188] sm:$0xff]
  %v78 = vld [vmem:[%s1 + $0x190] sm:$0xff]
  %v79 = vld [vmem:[%s1 + $0x198] sm:$0xff]
  %v80 = vld [vmem:[%s1 + $0x1a0] sm:$0xff]
  %v81 = vld [vmem:[%s1 + $0x1a8] sm:$0xff]
  %v82 = vld [vmem:[%s1 + $0x1b0] sm:$0xff]
  %v83 = vld [vmem:[%s1 + $0x1b8] sm:$0xff]
  %v84 = vld [vmem:[%s1 + $0x1c0] sm:$0xff]
  %v85 = vld [vmem:[%s1 + $0x1c8] sm:$0xff]
  %v86 = vld [vmem:[%s1 + $0x1d0] sm:$0xff]
  %v87 = vld [vmem:[%s1 + $0x1d8] sm:$0xff]
  %v88 = vld [vmem:[%s1 + $0x1e0] sm:$0xff]
  %v89 = vld [vmem:[%s1 + $0x1e8] sm:$0xff]
  %v90 = vld [vmem:[%s1 + $0x1f0] sm:$0xff]
  %v91 = vld [vmem:[%s1 + $0x1f8] sm:$0xff]
  %v92 = vld [vmem:[%s1 + $0x200] sm:$0xff]
  %v93 = vld [vmem:[%s1 + $0x208] sm:$0xff]
  %v94 = vld [vmem:[%s1 + $0x210] sm:$0xff]
  %v95 = vld [vmem:[%s1 + $0x218] sm:$0xff]
  %v96 = vld [vmem:[%s1 + $0x220] sm:$0xff]
  %v97 = vld [vmem:[%s1 + $0x228] sm:$0xff]
  %v98 = vld [vmem:[%s1 + $0x230] sm:$0xff]
  %v99 = vld [vmem:[%s1 + $0x238] sm:$0xff]
  %v100 = vld [vmem:[%s1 + $0x240] sm:$0xff]
  %v101 = vld [vmem:[%s1 + $0x248] sm:$0xff]
  %v102 = vld [vmem:[%s1 + $0x250] sm:$0xff]
  %v103 = vld [vmem:[%s1 + $0x258] sm:$0xff]
  %v104 = vld [vmem:[%s1 + $0x260] sm:$0xff]
  %v105 = vld [vmem:[%s1 + $0x268] sm:$0xff]
  %v106 = vld [vmem:[%s1 + $0x270] sm:$0xff]
  %v107 = vld [vmem:[%s1 + $0x278] sm:$0xff]
  %v108 = vld [vmem:[%s1 + $0x280] sm:$0xff]
  %v109 = vld [vmem:[%s1 + $0x288] sm:$0xff]
  %v110 = vld [vmem:[%s1 + $0x290] sm:$0xff]
  %v111 = vld [vmem:[%s1 + $0x298] sm:$0xff]
  %v112 = vld [vmem:[%s1 + $0x2a0] sm:$0xff]
  %v113 = vld [vmem:[%s1 + $0x2a8] sm:$0xff]
  %v114 = vld [vmem:[%s1 + $0x2b0] sm:$0xff]
  %v115 = vld [vmem:[%s1 + $0x2b8] sm:$0xff]
  %v116 = vld [vmem:[%s1 + $0x2c0] sm:$0xff]
  %v117 = vld [vmem:[%s1 + $0x2c8] sm:$0xff]
  %v118 = vld [vmem:[%s1 + $0x2d0] sm:$0xff]
  %v119 = vld [vmem:[%s1 + $0x2d8] sm:$0xff]
  %v120 = vld [vmem:[%s1 + $0x2e0] sm:$0xff]
  %v121 = vld [vmem:[%s1 + $0x2e8] sm:$0xff]
  %v122 = vld [vmem:[%s1 + $0x2f0] sm:$0xff]
  %v123 = vld [vmem:[%s1 + $0x2f8] sm:$0xff]
  %v124 = vld [vmem:[%s1 + $0x300] sm:$0xff]
  %v125 = vld [vmem:[%s1 + $0x308] sm:$0xff]
  %v126 = vld [vmem:[%s1 + $0x310] sm:$0xff]
  %v127 = vld [vmem:[%s1 + $0x318] sm:$0xff]
  %v128 = vld [vmem:[%s1 + $0x320] sm:$0xff]
  %v129 = vld [vmem:[%s1 + $0x328] sm:$0xff]
  %v130 = vld [vmem:[%s1 + $0x330] sm:$0xff]
  %v131 = vld [vmem:[%s1 + $0x338] sm:$0xff]
  %v132 = vld [vmem:[%s1 + $0x340] sm:$0xff]
  %v133 = vld [vmem:[%s1 + $0x348] sm:$0xff]
  %v134 = vld [vmem:[%s1 + $0x350] sm:$0xff]
  %v135 = vld [vmem:[%s1 + $0x358] sm:$0xff]
  %v136 = vld [vmem:[%s1 + $0x360] sm:$0xff]
  %v137 = vld [vmem:[%s1 + $0x368] sm:$0xff]
  %v138 = vld [vmem:[%s1 + $0x370] sm:$0xff]
  %v139 = vld [vmem:[%s1 + $0x378] sm:$0xff]
  %v140 = vld [vmem:[%s1 + $0x380] sm:$0xff]
  %v141 = vld [vmem:[%s1 + $0x388] sm:$0xff]
  %v142 = vld [vmem:[%s1 + $0x390] sm:$0xff]
  %v143 = vld [vmem:[%s1 + $0x398] sm:$0xff]
  %v144 = vld [vmem:[%s1 + $0x3a0] sm:$0xff]
  %v145 = vld [vmem:[%s1 + $0x3a8] sm:$0xff]
  %v146 = vld [vmem:[%s1 + $0x3b0] sm:$0xff]
  %v147 = vld [vmem:[%s1 + $0x3b8] sm:$0xff]
  %v148 = vld [vmem:[%s1 + $0x3c0] sm:$0xff]
  %v149 = vld [vmem:[%s1 + $0x3c8] sm:$0xff]
  %v150 = vld [vmem:[%s1 + $0x3d0] sm:$0xff]
  %v151 = vld [vmem:[%s1 + $0x3d8] sm:$0xff]
  %v152 = vld [vmem:[%s1 + $0x3e0] sm:$0xff]
  %v153 = vld [vmem:[%s1 + $0x3e8] sm:$0xff]
  %v154 = vld [vmem:[%s1 + $0x3f0] sm:$0xff]
  %v155 = vld [vmem:[%s1 + $0x3f8] sm:$0xff]
  %v156 = vld [vmem:[%s1 + $0x400] sm:$0xff]
  %v157 = vld [vmem:[%s1 + $0x408] sm:$0xff]
  %v158 = vld [vmem:[%s1 + $0x410] sm:$0xff]
  %v159 = vld [vmem:[%s1 + $0x418] sm:$0xff]
  %v160 = vld [vmem:[%s1 + $0x420] sm:$0xff]
  %v161 = vld [vmem:[%s1 + $0x428] sm:$0xff]
  %v162 = vld [vmem:[%s1 + $0x430] sm:$0xff]
  %v163 = vld [vmem:[%s1 + $0x438] sm:$0xff]
  %v164 = vld [vmem:[%s1 + $0x440] sm:$0xff]
  %v165 = vld [vmem:[%s1 + $0x448] sm:$0xff]
  %v166 = vld [vmem:[%s1 + $0x450] sm:$0xff]
  %v167 = vld [vmem:[%s1 + $0x458] sm:$0xff]
  %v168 = vld [vmem:[%s1 + $0x460] sm:$0xff]
  %v169 = vld [vmem:[%s1 + $0x468] sm:$0xff]
  %v170 = vld [vmem:[%s1 + $0x470] sm:$0xff]
  %v171 = vld [vmem:[%s1 + $0x478] sm:$0xff]
  %v172 = vld [vmem:[%s1 + $0x480] sm:$0xff]
  %v173 = vld [vmem:[%s1 + $0x488] sm:$0xff]
  %v174 = vld [vmem:[%s1 + $0x490] sm:$0xff]
  %v175 = vld [vmem:[%s1 + $0x498] sm:$0xff]
  %v176 = vld [vmem:[%s1 + $0x4a0] sm:$0xff]
  %v177 = vld [vmem:[%s1 + $0x4a8] sm:$0xff]
  %v178 = vld [vmem:[%s1 + $0x4b0] sm:$0xff]
  %v179 = vld [vmem:[%s1 + $0x4b8] sm:$0xff]
  %v180 = vld [vmem:[%s1 + $0x4c0] sm:$0xff]
  %v181 = vld [vmem:[%s1 + $0x4c8] sm:$0xff]
  %v182 = vld [vmem:[%s1 + $0x4d0] sm:$0xff]
  %v183 = vld [vmem:[%s1 + $0x4d8] sm:$0xff]
  %v184 = vld [vmem:[%s1 + $0x4e0] sm:$0xff]
  %v185 = vld [vmem:[%s1 + $0x4e8] sm:$0xff]
  %v186 = vld [vmem:[%s1 + $0x4f0] sm:$0xff]
  %v187 = vld [vmem:[%s1 + $0x4f8] sm:$0xff]
  %v188 = vld [vmem:[%s1 + $0x500] sm:$0xff]
  %v189 = vld [vmem:[%s1 + $0x508] sm:$0xff]
  %v190 = vld [vmem:[%s1 + $0x510] sm:$0xff]
  %v191 = vld [vmem:[%s1 + $0x518] sm:$0xff]
  %v192 = vld [vmem:[%s1 + $0x520] sm:$0xff]
  %v193 = vld [vmem:[%s1 + $0x528] sm:$0xff]
  %v194 = vld [vmem:[%s1 + $0x530] sm:$0xff]
  %v195 = vld [vmem:[%s1 + $0x538] sm:$0xff]
  %v196 = vld [vmem:[%s1 + $0x540] sm:$0xff]
  %v197 = vld [vmem:[%s1 + $0x548] sm:$0xff]
  %v198 = vld [vmem:[%s1 + $0x550] sm:$0xff]
  %v199 = vld [vmem:[%s1 + $0x558] sm:$0xff]
  %v200 = vld [vmem:[%s1 + $0x560] sm:$0xff]
  %v201 = vld [vmem:[%s1 + $0x568] sm:$0xff]
  %v202 = vld [vmem:[%s1 + $0x570] sm:$0xff]
  %v203 = vld [vmem:[%s1 + $0x578] sm:$0xff]
  %v204 = vld [vmem:[%s1 + $0x580] sm:$0xff]
  %v205 = vld [vmem:[%s1 + $0x588] sm:$0xff]
  %v206 = vld [vmem:[%s1 + $0x590] sm:$0xff]
  %v207 = vld [vmem:[%s1 + $0x598] sm:$0xff]
  %v208 = vld [vmem:[%s1 + $0x5a0] sm:$0xff]
  %v209 = vld [vmem:[%s1 + $0x5a8] sm:$0xff]
  %v210 = vld [vmem:[%s1 + $0x5b0] sm:$0xff]
  %v211 = vld [vmem:[%s1 + $0x5b8] sm:$0xff]
  %v212 = vld [vmem:[%s1 + $0x5c0] sm:$0xff]
  %v213 = vld [vmem:[%s1 + $0x5c8] sm:$0xff]
  %v214 = vld [vmem:[%s1 + $0x5d0] sm:$0xff]
  %v215 = vld [vmem:[%s1 + $0x5d8] sm:$0xff]
  %v216 = vld [vmem:[%s1 + $0x5e0] sm:$0xff]
  %v217 = vld [vmem:[%s1 + $0x5e8] sm:$0xff]
  %v218 = vld [vmem:[%s1 + $0x5f0] sm:$0xff]
  %v219 = vld [vmem:[%s1 + $0x5f8] sm:$0xff]
  %v220 = vld [vmem:[%s1 + $0x600] sm:$0xff]
  %v221 = vld [vmem:[%s1 + $0x608] sm:$0xff]
  %v222 = vld [vmem:[%s1 + $0x610] sm:$0xff]
  %v223 = vld [vmem:[%s1 + $0x618] sm:$0xff]
  %v224 = vld [vmem:[%s1 + $0x620] sm:$0xff]
  %v225 = vld [vmem:[%s1 + $0x628] sm:$0xff]
  %v226 = vld [vmem:[%s1 + $0x630] sm:$0xff]
  %v227 = vld [vmem:[%s1 + $0x638] sm:$0xff]
  %v228 = vld [vmem:[%s2] sm:$0x3]
  %v230 = vlaneseq
  %v231 = vshrl.u32 %v230, 7
  %v232 = vsub.s32 0, %v231
  %v233 = vrot.slane %v228, %v232
  %v234 = vlaneseq
  %v235 = vshrl.u32 %v234, 7
  %v236 = vsub.s32 1, %v235
  %v237 = vrot.slane %v228, %v236
  %v247 = vunpack.c.l.b16 %v21
  %v248 = vunpack.c.h.b16 %v21
  %v249 = vunpack.c.l.b16 %v22
  %v250 = vunpack.c.h.b16 %v22
  %v251 = vunpack.c.l.b16 %v23
  %v252 = vunpack.c.h.b16 %v23
  %v253 = vunpack.c.l.b16 %v24
  %v254 = vunpack.c.h.b16 %v24
  %v255 = vunpack.c.l.b16 %v25
  %v256 = vunpack.c.h.b16 %v25
  %v257 = vunpack.c.l.b16 %v26
  %v258 = vunpack.c.h.b16 %v26
  %v259 = vunpack.c.l.b16 %v27
  %v260 = vpack.c.b16 %v247, %v247
  %v261 = vpack.c.b16 %v248, %v248
  %v262 = vpack.c.b16 %v249, %v249
  %v263 = vpack.c.b16 %v250, %v250
  %v264 = vpack.c.b16 %v251, %v251
  %v265 = vpack.c.b16 %v252, %v252
  %v266 = vpack.c.b16 %v253, %v253
  %v267 = vpack.c.b16 %v254, %v254
  %v268 = vpack.c.b16 %v255, %v255
  %v269 = vpack.c.b16 %v256, %v256
  %v270 = vpack.c.b16 %v257, %v257
  %v271 = vpack.c.b16 %v258, %v258
  %v272 = vpack.c.b16 %v259, %v259
  %v485 = vunpack.c.l.b16 %v28
  %v486 = vunpack.c.h.b16 %v28
  %v487 = vunpack.c.l.b16 %v29
  %v488 = vunpack.c.h.b16 %v29
  %v489 = vunpack.c.l.b16 %v30
  %v490 = vunpack.c.h.b16 %v30
  %v491 = vunpack.c.l.b16 %v31
  %v492 = vunpack.c.h.b16 %v31
  %v493 = vunpack.c.l.b16 %v32
  %v494 = vunpack.c.h.b16 %v32
  %v495 = vunpack.c.l.b16 %v33
  %v496 = vunpack.c.h.b16 %v33
  %v497 = vunpack.c.l.b16 %v34
  %v498 = vunpack.c.h.b16 %v34
  %v499 = vunpack.c.l.b16 %v35
  %v500 = vunpack.c.h.b16 %v35
  %v501 = vunpack.c.l.b16 %v36
  %v502 = vunpack.c.h.b16 %v36
  %v503 = vunpack.c.l.b16 %v37
  %v504 = vunpack.c.h.b16 %v37
  %v505 = vunpack.c.l.b16 %v38
  %v506 = vunpack.c.h.b16 %v38
  %v507 = vunpack.c.l.b16 %v39
  %v508 = vunpack.c.h.b16 %v39
  %v509 = vunpack.c.l.b16 %v40
  %v510 = vunpack.c.h.b16 %v40
  %v511 = vunpack.c.l.b16 %v41
  %v512 = vunpack.c.h.b16 %v41
  %v513 = vunpack.c.l.b16 %v42
  %v514 = vunpack.c.h.b16 %v42
  %v515 = vunpack.c.l.b16 %v43
  %v516 = vunpack.c.h.b16 %v43
  %v517 = vunpack.c.l.b16 %v44
  %v518 = vunpack.c.h.b16 %v44
  %v519 = vunpack.c.l.b16 %v45
  %v520 = vunpack.c.h.b16 %v45
  %v521 = vunpack.c.l.b16 %v46
  %v522 = vunpack.c.h.b16 %v46
  %v523 = vunpack.c.l.b16 %v47
  %v524 = vunpack.c.h.b16 %v47
  %v525 = vunpack.c.l.b16 %v48
  %v526 = vunpack.c.h.b16 %v48
  %v527 = vunpack.c.l.b16 %v49
  %v528 = vunpack.c.h.b16 %v49
  %v529 = vunpack.c.l.b16 %v50
  %v530 = vunpack.c.h.b16 %v50
  %v531 = vunpack.c.l.b16 %v51
  %v532 = vunpack.c.h.b16 %v51
  %v533 = vunpack.c.l.b16 %v52
  %v534 = vunpack.c.h.b16 %v52
  %v535 = vunpack.c.l.b16 %v53
  %v536 = vunpack.c.h.b16 %v53
  %v537 = vunpack.c.l.b16 %v54
  %v538 = vunpack.c.h.b16 %v54
  %v539 = vunpack.c.l.b16 %v55
  %v540 = vunpack.c.h.b16 %v55
  %v541 = vunpack.c.l.b16 %v56
  %v542 = vunpack.c.h.b16 %v56
  %v543 = vunpack.c.l.b16 %v57
  %v544 = vunpack.c.h.b16 %v57
  %v545 = vunpack.c.l.b16 %v58
  %v546 = vunpack.c.h.b16 %v58
  %v547 = vunpack.c.l.b16 %v59
  %v548 = vunpack.c.h.b16 %v59
  %v549 = vunpack.c.l.b16 %v60
  %v550 = vunpack.c.h.b16 %v60
  %v551 = vunpack.c.l.b16 %v61
  %v552 = vunpack.c.h.b16 %v61
  %v553 = vunpack.c.l.b16 %v62
  %v554 = vunpack.c.h.b16 %v62
  %v555 = vunpack.c.l.b16 %v63
  %v556 = vunpack.c.h.b16 %v63
  %v557 = vunpack.c.l.b16 %v64
  %v558 = vunpack.c.h.b16 %v64
  %v559 = vunpack.c.l.b16 %v65
  %v560 = vunpack.c.h.b16 %v65
  %v561 = vunpack.c.l.b16 %v66
  %v562 = vunpack.c.h.b16 %v66
  %v563 = vunpack.c.l.b16 %v67
  %v564 = vunpack.c.h.b16 %v67
  %v565 = vunpack.c.l.b16 %v68
  %v566 = vunpack.c.h.b16 %v68
  %v567 = vunpack.c.l.b16 %v69
  %v568 = vunpack.c.h.b16 %v69
  %v569 = vunpack.c.l.b16 %v70
  %v570 = vunpack.c.h.b16 %v70
  %v571 = vunpack.c.l.b16 %v71
  %v572 = vunpack.c.h.b16 %v71
  %v573 = vunpack.c.l.b16 %v72
  %v574 = vunpack.c.h.b16 %v72
  %v575 = vunpack.c.l.b16 %v73
  %v576 = vunpack.c.h.b16 %v73
  %v577 = vunpack.c.l.b16 %v74
  %v578 = vunpack.c.h.b16 %v74
  %v579 = vunpack.c.l.b16 %v75
  %v580 = vunpack.c.h.b16 %v75
  %v581 = vunpack.c.l.b16 %v76
  %v582 = vunpack.c.h.b16 %v76
  %v583 = vunpack.c.l.b16 %v77
  %v584 = vunpack.c.h.b16 %v77
  %v585 = vunpack.c.l.b16 %v78
  %v586 = vunpack.c.h.b16 %v78
  %v587 = vunpack.c.l.b16 %v79
  %v588 = vunpack.c.h.b16 %v79
  %v589 = vunpack.c.l.b16 %v80
  %v590 = vunpack.c.h.b16 %v80
  %v591 = vunpack.c.l.b16 %v81
  %v592 = vunpack.c.h.b16 %v81
  %v593 = vunpack.c.l.b16 %v82
  %v594 = vunpack.c.h.b16 %v82
  %v595 = vunpack.c.l.b16 %v83
  %v596 = vunpack.c.h.b16 %v83
  %v597 = vunpack.c.l.b16 %v84
  %v598 = vunpack.c.h.b16 %v84
  %v599 = vunpack.c.l.b16 %v85
  %v600 = vunpack.c.h.b16 %v85
  %v601 = vunpack.c.l.b16 %v86
  %v602 = vunpack.c.h.b16 %v86
  %v603 = vunpack.c.l.b16 %v87
  %v604 = vunpack.c.h.b16 %v87
  %v605 = vunpack.c.l.b16 %v88
  %v606 = vunpack.c.h.b16 %v88
  %v607 = vunpack.c.l.b16 %v89
  %v608 = vunpack.c.h.b16 %v89
  %v609 = vunpack.c.l.b16 %v90
  %v610 = vunpack.c.h.b16 %v90
  %v611 = vunpack.c.l.b16 %v91
  %v612 = vunpack.c.h.b16 %v91
  %v613 = vunpack.c.l.b16 %v92
  %v614 = vunpack.c.h.b16 %v92
  %v615 = vunpack.c.l.b16 %v93
  %v616 = vunpack.c.h.b16 %v93
  %v617 = vunpack.c.l.b16 %v94
  %v618 = vunpack.c.h.b16 %v94
  %v619 = vunpack.c.l.b16 %v95
  %v620 = vunpack.c.h.b16 %v95
  %v621 = vunpack.c.l.b16 %v96
  %v622 = vunpack.c.h.b16 %v96
  %v623 = vunpack.c.l.b16 %v97
  %v624 = vunpack.c.h.b16 %v97
  %v625 = vunpack.c.l.b16 %v98
  %v626 = vunpack.c.h.b16 %v98
  %v627 = vunpack.c.l.b16 %v99
  %v628 = vunpack.c.h.b16 %v99
  %v629 = vunpack.c.l.b16 %v100
  %v630 = vunpack.c.h.b16 %v100
  %v631 = vunpack.c.l.b16 %v101
  %v632 = vunpack.c.h.b16 %v101
  %v633 = vunpack.c.l.b16 %v102
  %v634 = vunpack.c.h.b16 %v102
  %v635 = vunpack.c.l.b16 %v103
  %v636 = vunpack.c.h.b16 %v103
  %v637 = vunpack.c.l.b16 %v104
  %v638 = vunpack.c.h.b16 %v104
  %v639 = vunpack.c.l.b16 %v105
  %v640 = vunpack.c.h.b16 %v105
  %v641 = vunpack.c.l.b16 %v106
  %v642 = vunpack.c.h.b16 %v106
  %v643 = vunpack.c.l.b16 %v107
  %v644 = vunpack.c.h.b16 %v107
  %v645 = vunpack.c.l.b16 %v108
  %v646 = vunpack.c.h.b16 %v108
  %v647 = vunpack.c.l.b16 %v109
  %v648 = vunpack.c.h.b16 %v109
  %v649 = vunpack.c.l.b16 %v110
  %v650 = vunpack.c.h.b16 %v110
  %v651 = vunpack.c.l.b16 %v111
  %v652 = vunpack.c.h.b16 %v111
  %v653 = vunpack.c.l.b16 %v112
  %v654 = vunpack.c.h.b16 %v112
  %v655 = vunpack.c.l.b16 %v113
  %v656 = vunpack.c.h.b16 %v113
  %v657 = vunpack.c.l.b16 %v114
  %v658 = vunpack.c.h.b16 %v114
  %v659 = vunpack.c.l.b16 %v115
  %v660 = vunpack.c.h.b16 %v115
  %v661 = vunpack.c.l.b16 %v116
  %v662 = vunpack.c.h.b16 %v116
  %v663 = vunpack.c.l.b16 %v117
  %v664 = vunpack.c.h.b16 %v117
  %v665 = vunpack.c.l.b16 %v118
  %v666 = vunpack.c.h.b16 %v118
  %v667 = vunpack.c.l.b16 %v119
  %v668 = vunpack.c.h.b16 %v119
  %v669 = vunpack.c.l.b16 %v120
  %v670 = vunpack.c.h.b16 %v120
  %v671 = vunpack.c.l.b16 %v121
  %v672 = vunpack.c.h.b16 %v121
  %v673 = vunpack.c.l.b16 %v122
  %v674 = vunpack.c.h.b16 %v122
  %v675 = vunpack.c.l.b16 %v123
  %v676 = vunpack.c.h.b16 %v123
  %v677 = vunpack.c.l.b16 %v124
  %v678 = vunpack.c.h.b16 %v124
  %v679 = vunpack.c.l.b16 %v125
  %v680 = vunpack.c.h.b16 %v125
  %v681 = vunpack.c.l.b16 %v126
  %v682 = vunpack.c.h.b16 %v126
  %v683 = vunpack.c.l.b16 %v127
  %v684 = vunpack.c.h.b16 %v127
  %v685 = vunpack.c.l.b16 %v128
  %v686 = vunpack.c.h.b16 %v128
  %v687 = vunpack.c.l.b16 %v129
  %v688 = vunpack.c.h.b16 %v129
  %v689 = vunpack.c.l.b16 %v130
  %v690 = vunpack.c.h.b16 %v130
  %v691 = vunpack.c.l.b16 %v131
  %v692 = vunpack.c.h.b16 %v131
  %v693 = vunpack.c.l.b16 %v132
  %v694 = vunpack.c.h.b16 %v132
  %v695 = vunpack.c.l.b16 %v133
  %v696 = vunpack.c.h.b16 %v133
  %v697 = vunpack.c.l.b16 %v134
  %v698 = vunpack.c.h.b16 %v134
  %v699 = vunpack.c.l.b16 %v135
  %v700 = vunpack.c.h.b16 %v135
  %v701 = vunpack.c.l.b16 %v136
  %v702 = vunpack.c.h.b16 %v136
  %v703 = vunpack.c.l.b16 %v137
  %v704 = vunpack.c.h.b16 %v137
  %v705 = vunpack.c.l.b16 %v138
  %v706 = vunpack.c.h.b16 %v138
  %v707 = vunpack.c.l.b16 %v139
  %v708 = vunpack.c.h.b16 %v139
  %v709 = vunpack.c.l.b16 %v140
  %v710 = vunpack.c.h.b16 %v140
  %v711 = vunpack.c.l.b16 %v141
  %v712 = vunpack.c.h.b16 %v141
  %v713 = vunpack.c.l.b16 %v142
  %v714 = vunpack.c.h.b16 %v142
  %v715 = vunpack.c.l.b16 %v143
  %v716 = vunpack.c.h.b16 %v143
  %v717 = vunpack.c.l.b16 %v144
  %v718 = vunpack.c.h.b16 %v144
  %v719 = vunpack.c.l.b16 %v145
  %v720 = vunpack.c.h.b16 %v145
  %v721 = vunpack.c.l.b16 %v146
  %v722 = vunpack.c.h.b16 %v146
  %v723 = vunpack.c.l.b16 %v147
  %v724 = vunpack.c.h.b16 %v147
  %v725 = vunpack.c.l.b16 %v148
  %v726 = vunpack.c.h.b16 %v148
  %v727 = vunpack.c.l.b16 %v149
  %v728 = vunpack.c.h.b16 %v149
  %v729 = vunpack.c.l.b16 %v150
  %v730 = vunpack.c.h.b16 %v150
  %v731 = vunpack.c.l.b16 %v151
  %v732 = vunpack.c.h.b16 %v151
  %v733 = vunpack.c.l.b16 %v152
  %v734 = vunpack.c.h.b16 %v152
  %v735 = vunpack.c.l.b16 %v153
  %v736 = vunpack.c.h.b16 %v153
  %v737 = vunpack.c.l.b16 %v154
  %v738 = vunpack.c.h.b16 %v154
  %v739 = vunpack.c.l.b16 %v155
  %v740 = vunpack.c.h.b16 %v155
  %v741 = vunpack.c.l.b16 %v156
  %v742 = vunpack.c.h.b16 %v156
  %v743 = vunpack.c.l.b16 %v157
  %v744 = vunpack.c.h.b16 %v157
  %v745 = vunpack.c.l.b16 %v158
  %v746 = vunpack.c.h.b16 %v158
  %v747 = vunpack.c.l.b16 %v159
  %v748 = vunpack.c.h.b16 %v159
  %v749 = vunpack.c.l.b16 %v160
  %v750 = vunpack.c.h.b16 %v160
  %v751 = vunpack.c.l.b16 %v161
  %v752 = vunpack.c.h.b16 %v161
  %v753 = vunpack.c.l.b16 %v162
  %v754 = vunpack.c.h.b16 %v162
  %v755 = vunpack.c.l.b16 %v163
  %v756 = vunpack.c.h.b16 %v163
  %v757 = vunpack.c.l.b16 %v164
  %v758 = vunpack.c.h.b16 %v164
  %v759 = vunpack.c.l.b16 %v165
  %v760 = vunpack.c.h.b16 %v165
  %v761 = vunpack.c.l.b16 %v166
  %v762 = vunpack.c.h.b16 %v166
  %v763 = vunpack.c.l.b16 %v167
  %v764 = vunpack.c.h.b16 %v167
  %v765 = vunpack.c.l.b16 %v168
  %v766 = vunpack.c.h.b16 %v168
  %v767 = vunpack.c.l.b16 %v169
  %v768 = vunpack.c.h.b16 %v169
  %v769 = vunpack.c.l.b16 %v170
  %v770 = vunpack.c.h.b16 %v170
  %v771 = vunpack.c.l.b16 %v171
  %v772 = vunpack.c.h.b16 %v171
  %v773 = vunpack.c.l.b16 %v172
  %v774 = vunpack.c.h.b16 %v172
  %v775 = vunpack.c.l.b16 %v173
  %v776 = vunpack.c.h.b16 %v173
  %v777 = vunpack.c.l.b16 %v174
  %v778 = vunpack.c.h.b16 %v174
  %v779 = vunpack.c.l.b16 %v175
  %v780 = vunpack.c.h.b16 %v175
  %v781 = vunpack.c.l.b16 %v176
  %v782 = vunpack.c.h.b16 %v176
  %v783 = vunpack.c.l.b16 %v177
  %v784 = vunpack.c.h.b16 %v177
  %v785 = vunpack.c.l.b16 %v178
  %v786 = vunpack.c.h.b16 %v178
  %v787 = vunpack.c.l.b16 %v179
  %v788 = vunpack.c.h.b16 %v179
  %v789 = vunpack.c.l.b16 %v180
  %v790 = vunpack.c.h.b16 %v180
  %v791 = vunpack.c.l.b16 %v181
  %v792 = vunpack.c.h.b16 %v181
  %v793 = vunpack.c.l.b16 %v182
  %v794 = vunpack.c.h.b16 %v182
  %v795 = vunpack.c.l.b16 %v183
  %v796 = vunpack.c.h.b16 %v183
  %v797 = vunpack.c.l.b16 %v184
  %v798 = vunpack.c.h.b16 %v184
  %v799 = vunpack.c.l.b16 %v185
  %v800 = vunpack.c.h.b16 %v185
  %v801 = vunpack.c.l.b16 %v186
  %v802 = vunpack.c.h.b16 %v186
  %v803 = vunpack.c.l.b16 %v187
  %v804 = vunpack.c.h.b16 %v187
  %v805 = vunpack.c.l.b16 %v188
  %v806 = vunpack.c.h.b16 %v188
  %v807 = vunpack.c.l.b16 %v189
  %v808 = vunpack.c.h.b16 %v189
  %v809 = vunpack.c.l.b16 %v190
  %v810 = vunpack.c.h.b16 %v190
  %v811 = vunpack.c.l.b16 %v191
  %v812 = vunpack.c.h.b16 %v191
  %v813 = vunpack.c.l.b16 %v192
  %v814 = vunpack.c.h.b16 %v192
  %v815 = vunpack.c.l.b16 %v193
  %v816 = vunpack.c.h.b16 %v193
  %v817 = vunpack.c.l.b16 %v194
  %v818 = vunpack.c.h.b16 %v194
  %v819 = vunpack.c.l.b16 %v195
  %v820 = vunpack.c.h.b16 %v195
  %v821 = vunpack.c.l.b16 %v196
  %v822 = vunpack.c.h.b16 %v196
  %v823 = vunpack.c.l.b16 %v197
  %v824 = vunpack.c.h.b16 %v197
  %v825 = vunpack.c.l.b16 %v198
  %v826 = vunpack.c.h.b16 %v198
  %v827 = vunpack.c.l.b16 %v199
  %v828 = vunpack.c.h.b16 %v199
  %v829 = vunpack.c.l.b16 %v200
  %v830 = vunpack.c.h.b16 %v200
  %v831 = vunpack.c.l.b16 %v201
  %v832 = vunpack.c.h.b16 %v201
  %v833 = vunpack.c.l.b16 %v202
  %v834 = vunpack.c.h.b16 %v202
  %v835 = vunpack.c.l.b16 %v203
  %v836 = vunpack.c.h.b16 %v203
  %v837 = vunpack.c.l.b16 %v204
  %v838 = vunpack.c.h.b16 %v204
  %v839 = vunpack.c.l.b16 %v205
  %v840 = vunpack.c.h.b16 %v205
  %v841 = vunpack.c.l.b16 %v206
  %v842 = vunpack.c.h.b16 %v206
  %v843 = vunpack.c.l.b16 %v207
  %v844 = vunpack.c.h.b16 %v207
  %v845 = vunpack.c.l.b16 %v208
  %v846 = vunpack.c.h.b16 %v208
  %v847 = vunpack.c.l.b16 %v209
  %v848 = vunpack.c.h.b16 %v209
  %v849 = vunpack.c.l.b16 %v210
  %v850 = vunpack.c.h.b16 %v210
  %v851 = vunpack.c.l.b16 %v211
  %v852 = vunpack.c.h.b16 %v211
  %v853 = vunpack.c.l.b16 %v212
  %v854 = vunpack.c.h.b16 %v212
  %v855 = vunpack.c.l.b16 %v213
  %v856 = vunpack.c.h.b16 %v213
  %v857 = vunpack.c.l.b16 %v214
  %v858 = vunpack.c.h.b16 %v214
  %v859 = vunpack.c.l.b16 %v215
  %v860 = vunpack.c.h.b16 %v215
  %v861 = vunpack.c.l.b16 %v216
  %v862 = vunpack.c.h.b16 %v216
  %v863 = vunpack.c.l.b16 %v217
  %v864 = vunpack.c.h.b16 %v217
  %v865 = vunpack.c.l.b16 %v218
  %v866 = vunpack.c.h.b16 %v218
  %v867 = vunpack.c.l.b16 %v219
  %v868 = vunpack.c.h.b16 %v219
  %v869 = vunpack.c.l.b16 %v220
  %v870 = vunpack.c.h.b16 %v220
  %v871 = vunpack.c.l.b16 %v221
  %v872 = vunpack.c.h.b16 %v221
  %v873 = vunpack.c.l.b16 %v222
  %v874 = vunpack.c.h.b16 %v222
  %v875 = vunpack.c.l.b16 %v223
  %v876 = vunpack.c.h.b16 %v223
  %v877 = vunpack.c.l.b16 %v224
  %v878 = vunpack.c.h.b16 %v224
  %v879 = vunpack.c.l.b16 %v225
  %v880 = vunpack.c.h.b16 %v225
  %v881 = vunpack.c.l.b16 %v226
  %v882 = vunpack.c.h.b16 %v226
  %v883 = vunpack.c.l.b16 %v227
  %v884 = vunpack.c.h.b16 %v227
  %v885 = vpack.c.b16 %v487, %v485
  %v886 = vpack.c.b16 %v488, %v486
  %v887 = vpack.c.b16 %v491, %v489
  %v888 = vpack.c.b16 %v492, %v490
  %v889 = vpack.c.b16 %v495, %v493
  %v890 = vpack.c.b16 %v496, %v494
  %v891 = vpack.c.b16 %v499, %v497
  %v892 = vpack.c.b16 %v500, %v498
  %v893 = vpack.c.b16 %v503, %v501
  %v894 = vpack.c.b16 %v504, %v502
  %v895 = vpack.c.b16 %v507, %v505
  %v896 = vpack.c.b16 %v508, %v506
  %v897 = vpack.c.b16 %v511, %v509
  %v898 = vpack.c.b16 %v512, %v510
  %v899 = vpack.c.b16 %v515, %v513
  %v900 = vpack.c.b16 %v516, %v514
  %v901 = vpack.c.b16 %v519, %v517
  %v902 = vpack.c.b16 %v520, %v518
  %v903 = vpack.c.b16 %v523, %v521
  %v904 = vpack.c.b16 %v524, %v522
  %v905 = vpack.c.b16 %v527, %v525
  %v906 = vpack.c.b16 %v528, %v526
  %v907 = vpack.c.b16 %v531, %v529
  %v908 = vpack.c.b16 %v532, %v530
  %v909 = vpack.c.b16 %v535, %v533
  %v910 = vpack.c.b16 %v536, %v534
  %v911 = vpack.c.b16 %v539, %v537
  %v912 = vpack.c.b16 %v540, %v538
  %v913 = vpack.c.b16 %v543, %v541
  %v914 = vpack.c.b16 %v544, %v542
  %v915 = vpack.c.b16 %v547, %v545
  %v916 = vpack.c.b16 %v548, %v546
  %v917 = vpack.c.b16 %v551, %v549
  %v918 = vpack.c.b16 %v552, %v550
  %v919 = vpack.c.b16 %v555, %v553
  %v920 = vpack.c.b16 %v556, %v554
  %v921 = vpack.c.b16 %v559, %v557
  %v922 = vpack.c.b16 %v560, %v558
  %v923 = vpack.c.b16 %v563, %v561
  %v924 = vpack.c.b16 %v564, %v562
  %v925 = vpack.c.b16 %v567, %v565
  %v926 = vpack.c.b16 %v568, %v566
  %v927 = vpack.c.b16 %v571, %v569
  %v928 = vpack.c.b16 %v572, %v570
  %v929 = vpack.c.b16 %v575, %v573
  %v930 = vpack.c.b16 %v576, %v574
  %v931 = vpack.c.b16 %v579, %v577
  %v932 = vpack.c.b16 %v580, %v578
  %v933 = vpack.c.b16 %v583, %v581
  %v934 = vpack.c.b16 %v584, %v582
  %v935 = vpack.c.b16 %v587, %v585
  %v936 = vpack.c.b16 %v588, %v586
  %v937 = vpack.c.b16 %v591, %v589
  %v938 = vpack.c.b16 %v592, %v590
  %v939 = vpack.c.b16 %v595, %v593
  %v940 = vpack.c.b16 %v596, %v594
  %v941 = vpack.c.b16 %v599, %v597
  %v942 = vpack.c.b16 %v600, %v598
  %v943 = vpack.c.b16 %v603, %v601
  %v944 = vpack.c.b16 %v604, %v602
  %v945 = vpack.c.b16 %v607, %v605
  %v946 = vpack.c.b16 %v608, %v606
  %v947 = vpack.c.b16 %v611, %v609
  %v948 = vpack.c.b16 %v612, %v610
  %v949 = vpack.c.b16 %v615, %v613
  %v950 = vpack.c.b16 %v616, %v614
  %v951 = vpack.c.b16 %v619, %v617
  %v952 = vpack.c.b16 %v620, %v618
  %v953 = vpack.c.b16 %v623, %v621
  %v954 = vpack.c.b16 %v624, %v622
  %v955 = vpack.c.b16 %v627, %v625
  %v956 = vpack.c.b16 %v628, %v626
  %v957 = vpack.c.b16 %v631, %v629
  %v958 = vpack.c.b16 %v632, %v630
  %v959 = vpack.c.b16 %v635, %v633
  %v960 = vpack.c.b16 %v636, %v634
  %v961 = vpack.c.b16 %v639, %v637
  %v962 = vpack.c.b16 %v640, %v638
  %v963 = vpack.c.b16 %v643, %v641
  %v964 = vpack.c.b16 %v644, %v642
  %v965 = vpack.c.b16 %v647, %v645
  %v966 = vpack.c.b16 %v648, %v646
  %v967 = vpack.c.b16 %v651, %v649
  %v968 = vpack.c.b16 %v652, %v650
  %v969 = vpack.c.b16 %v655, %v653
  %v970 = vpack.c.b16 %v656, %v654
  %v971 = vpack.c.b16 %v659, %v657
  %v972 = vpack.c.b16 %v660, %v658
  %v973 = vpack.c.b16 %v663, %v661
  %v974 = vpack.c.b16 %v664, %v662
  %v975 = vpack.c.b16 %v667, %v665
  %v976 = vpack.c.b16 %v668, %v666
  %v977 = vpack.c.b16 %v671, %v669
  %v978 = vpack.c.b16 %v672, %v670
  %v979 = vpack.c.b16 %v675, %v673
  %v980 = vpack.c.b16 %v676, %v674
  %v981 = vpack.c.b16 %v679, %v677
  %v982 = vpack.c.b16 %v680, %v678
  %v983 = vpack.c.b16 %v683, %v681
  %v984 = vpack.c.b16 %v684, %v682
  %v985 = vpack.c.b16 %v687, %v685
  %v986 = vpack.c.b16 %v688, %v686
  %v987 = vpack.c.b16 %v691, %v689
  %v988 = vpack.c.b16 %v692, %v690
  %v989 = vpack.c.b16 %v695, %v693
  %v990 = vpack.c.b16 %v696, %v694
  %v991 = vpack.c.b16 %v699, %v697
  %v992 = vpack.c.b16 %v700, %v698
  %v993 = vpack.c.b16 %v703, %v701
  %v994 = vpack.c.b16 %v704, %v702
  %v995 = vpack.c.b16 %v707, %v705
  %v996 = vpack.c.b16 %v708, %v706
  %v997 = vpack.c.b16 %v711, %v709
  %v998 = vpack.c.b16 %v712, %v710
  %v999 = vpack.c.b16 %v715, %v713
  %v1000 = vpack.c.b16 %v716, %v714
  %v1001 = vpack.c.b16 %v719, %v717
  %v1002 = vpack.c.b16 %v720, %v718
  %v1003 = vpack.c.b16 %v723, %v721
  %v1004 = vpack.c.b16 %v724, %v722
  %v1005 = vpack.c.b16 %v727, %v725
  %v1006 = vpack.c.b16 %v728, %v726
  %v1007 = vpack.c.b16 %v731, %v729
  %v1008 = vpack.c.b16 %v732, %v730
  %v1009 = vpack.c.b16 %v735, %v733
  %v1010 = vpack.c.b16 %v736, %v734
  %v1011 = vpack.c.b16 %v739, %v737
  %v1012 = vpack.c.b16 %v740, %v738
  %v1013 = vpack.c.b16 %v743, %v741
  %v1014 = vpack.c.b16 %v744, %v742
  %v1015 = vpack.c.b16 %v747, %v745
  %v1016 = vpack.c.b16 %v748, %v746
  %v1017 = vpack.c.b16 %v751, %v749
  %v1018 = vpack.c.b16 %v752, %v750
  %v1019 = vpack.c.b16 %v755, %v753
  %v1020 = vpack.c.b16 %v756, %v754
  %v1021 = vpack.c.b16 %v759, %v757
  %v1022 = vpack.c.b16 %v760, %v758
  %v1023 = vpack.c.b16 %v763, %v761
  %v1024 = vpack.c.b16 %v764, %v762
  %v1025 = vpack.c.b16 %v767, %v765
  %v1026 = vpack.c.b16 %v768, %v766
  %v1027 = vpack.c.b16 %v771, %v769
  %v1028 = vpack.c.b16 %v772, %v770
  %v1029 = vpack.c.b16 %v775, %v773
  %v1030 = vpack.c.b16 %v776, %v774
  %v1031 = vpack.c.b16 %v779, %v777
  %v1032 = vpack.c.b16 %v780, %v778
  %v1033 = vpack.c.b16 %v783, %v781
  %v1034 = vpack.c.b16 %v784, %v782
  %v1035 = vpack.c.b16 %v787, %v785
  %v1036 = vpack.c.b16 %v788, %v786
  %v1037 = vpack.c.b16 %v791, %v789
  %v1038 = vpack.c.b16 %v792, %v790
  %v1039 = vpack.c.b16 %v795, %v793
  %v1040 = vpack.c.b16 %v796, %v794
  %v1041 = vpack.c.b16 %v799, %v797
  %v1042 = vpack.c.b16 %v800, %v798
  %v1043 = vpack.c.b16 %v803, %v801
  %v1044 = vpack.c.b16 %v804, %v802
  %v1045 = vpack.c.b16 %v807, %v805
  %v1046 = vpack.c.b16 %v808, %v806
  %v1047 = vpack.c.b16 %v811, %v809
  %v1048 = vpack.c.b16 %v812, %v810
  %v1049 = vpack.c.b16 %v815, %v813
  %v1050 = vpack.c.b16 %v816, %v814
  %v1051 = vpack.c.b16 %v819, %v817
  %v1052 = vpack.c.b16 %v820, %v818
  %v1053 = vpack.c.b16 %v823, %v821
  %v1054 = vpack.c.b16 %v824, %v822
  %v1055 = vpack.c.b16 %v827, %v825
  %v1056 = vpack.c.b16 %v828, %v826
  %v1057 = vpack.c.b16 %v831, %v829
  %v1058 = vpack.c.b16 %v832, %v830
  %v1059 = vpack.c.b16 %v835, %v833
  %v1060 = vpack.c.b16 %v836, %v834
  %v1061 = vpack.c.b16 %v839, %v837
  %v1062 = vpack.c.b16 %v840, %v838
  %v1063 = vpack.c.b16 %v843, %v841
  %v1064 = vpack.c.b16 %v844, %v842
  %v1065 = vpack.c.b16 %v847, %v845
  %v1066 = vpack.c.b16 %v848, %v846
  %v1067 = vpack.c.b16 %v851, %v849
  %v1068 = vpack.c.b16 %v852, %v850
  %v1069 = vpack.c.b16 %v855, %v853
  %v1070 = vpack.c.b16 %v856, %v854
  %v1071 = vpack.c.b16 %v859, %v857
  %v1072 = vpack.c.b16 %v860, %v858
  %v1073 = vpack.c.b16 %v863, %v861
  %v1074 = vpack.c.b16 %v864, %v862
  %v1075 = vpack.c.b16 %v867, %v865
  %v1076 = vpack.c.b16 %v868, %v866
  %v1077 = vpack.c.b16 %v871, %v869
  %v1078 = vpack.c.b16 %v872, %v870
  %v1079 = vpack.c.b16 %v875, %v873
  %v1080 = vpack.c.b16 %v876, %v874
  %v1081 = vpack.c.b16 %v879, %v877
  %v1082 = vpack.c.b16 %v880, %v878
  %v1083 = vpack.c.b16 %v883, %v881
  %v1084 = vpack.c.b16 %v884, %v882
  %vm1285 = vcmask 523264
  %v1287 = vsel %vm1285, %v272, 0
  %1289 = vmatprep.subr.bf16.mxu0 %v886
  %1290 = vmatpush1.bf16.msra.mxu0 %v885
  %1291 = vmatprep.subr.bf16.mxu0 %v888
  %1292 = vmatpush1.bf16.msra.mxu0 %v887
  %1293 = vmatprep.subr.bf16.mxu0 %v890
  %1294 = vmatpush1.bf16.msra.mxu0 %v889
  %1295 = vmatprep.subr.bf16.mxu0 %v892
  %1296 = vmatpush1.bf16.msra.mxu0 %v891
  %1297 = vmatprep.subr.bf16.mxu0 %v894
  %1298 = vmatpush1.bf16.msra.mxu0 %v893
  %1299 = vmatprep.subr.bf16.mxu0 %v896
  %1300 = vmatpush1.bf16.msra.mxu0 %v895
  %1301 = vmatprep.subr.bf16.mxu0 %v898
  %1302 = vmatpush1.bf16.msra.mxu0 %v897
  %1303 = vmatprep.subr.bf16.mxu0 %v900
  %1304 = vmatpush1.bf16.msra.mxu0 %v899
  %1305 = vmatprep.subr.bf16.mxu0 %v902
  %1306 = vmatpush1.bf16.msra.mxu0 %v901
  %1307 = vmatprep.subr.bf16.mxu0 %v904
  %1308 = vmatpush1.bf16.msra.mxu0 %v903
  %1309 = vmatprep.subr.bf16.mxu0 %v906
  %1310 = vmatpush1.bf16.msra.mxu0 %v905
  %1311 = vmatprep.subr.bf16.mxu0 %v908
  %1312 = vmatpush1.bf16.msra.mxu0 %v907
  %1313 = vmatprep.subr.bf16.mxu0 %v910
  %1314 = vmatpush1.bf16.msra.mxu0 %v909
  %1315 = vmatprep.subr.bf16.mxu0 %v912
  %1316 = vmatpush1.bf16.msra.mxu0 %v911
  %1317 = vmatprep.subr.bf16.mxu0 %v914
  %1318 = vmatpush1.bf16.msra.mxu0 %v913
  %1319 = vmatprep.subr.bf16.mxu0 %v916
  %1320 = vmatpush1.bf16.msra.mxu0 %v915
  %1321 = vmatprep.mubr.bf16.mxu0 %v261
  %1322 = vmatmul.mubr.bf16.gmra.mrb[0].mxu0 %v260
  %v1323 = vpop.f32.mrb[0].mxu0
  %v1324 = vadd.f32 %v233, %v1323
  %v1325 = vpop.f32.mrb[0].mxu0
  %v1326 = vadd.f32 %v237, %v1325
  %v1327 = vpop.f32.mrb[0].mxu0
  %v1328 = vpop.f32.mrb[0].mxu0
  %1329 = vdwg.mxu0
  %1330 = vmatprep.subr.bf16.mxu0 %v918
  %1331 = vmatpush1.bf16.msra.mxu0 %v917
  %1332 = vmatprep.subr.bf16.mxu0 %v920
  %1333 = vmatpush1.bf16.msra.mxu0 %v919
  %1334 = vmatprep.subr.bf16.mxu0 %v922
  %1335 = vmatpush1.bf16.msra.mxu0 %v921
  %1336 = vmatprep.subr.bf16.mxu0 %v924
  %1337 = vmatpush1.bf16.msra.mxu0 %v923
  %1338 = vmatprep.subr.bf16.mxu0 %v926
  %1339 = vmatpush1.bf16.msra.mxu0 %v925
  %1340 = vmatprep.subr.bf16.mxu0 %v928
  %1341 = vmatpush1.bf16.msra.mxu0 %v927
  %1342 = vmatprep.subr.bf16.mxu0 %v930
  %1343 = vmatpush1.bf16.msra.mxu0 %v929
  %1344 = vmatprep.subr.bf16.mxu0 %v932
  %1345 = vmatpush1.bf16.msra.mxu0 %v931
  %1346 = vmatprep.subr.bf16.mxu0 %v934
  %1347 = vmatpush1.bf16.msra.mxu0 %v933
  %1348 = vmatprep.subr.bf16.mxu0 %v936
  %1349 = vmatpush1.bf16.msra.mxu0 %v935
  %1350 = vmatprep.subr.bf16.mxu0 %v938
  %1351 = vmatpush1.bf16.msra.mxu0 %v937
  %1352 = vmatprep.subr.bf16.mxu0 %v940
  %1353 = vmatpush1.bf16.msra.mxu0 %v939
  %1354 = vmatprep.subr.bf16.mxu0 %v942
  %1355 = vmatpush1.bf16.msra.mxu0 %v941
  %1356 = vmatprep.subr.bf16.mxu0 %v944
  %1357 = vmatpush1.bf16.msra.mxu0 %v943
  %1358 = vmatprep.subr.bf16.mxu0 %v946
  %1359 = vmatpush1.bf16.msra.mxu0 %v945
  %1360 = vmatprep.subr.bf16.mxu0 %v948
  %1361 = vmatpush1.bf16.msra.mxu0 %v947
  %1362 = vmatprep.mubr.bf16.mxu0 %v263
  %1363 = vmatmul.mubr.bf16.gmra.mrb[0].mxu0 %v262
  %v1364 = vpop.f32.mrb[0].mxu0
  %v1365 = vadd.f32 %v1324, %v1364
  %v1366 = vpop.f32.mrb[0].mxu0
  %v1367 = vadd.f32 %v1326, %v1366
  %v1368 = vpop.f32.mrb[0].mxu0
  %v1369 = vpop.f32.mrb[0].mxu0
  %1370 = vdwg.mxu0
  %1371 = vmatprep.subr.bf16.mxu0 %v950
  %1372 = vmatpush1.bf16.msra.mxu0 %v949
  %1373 = vmatprep.subr.bf16.mxu0 %v952
  %1374 = vmatpush1.bf16.msra.mxu0 %v951
  %1375 = vmatprep.subr.bf16.mxu0 %v954
  %1376 = vmatpush1.bf16.msra.mxu0 %v953
  %1377 = vmatprep.subr.bf16.mxu0 %v956
  %1378 = vmatpush1.bf16.msra.mxu0 %v955
  %1379 = vmatprep.subr.bf16.mxu0 %v958
  %1380 = vmatpush1.bf16.msra.mxu0 %v957
  %1381 = vmatprep.subr.bf16.mxu0 %v960
  %1382 = vmatpush1.bf16.msra.mxu0 %v959
  %1383 = vmatprep.subr.bf16.mxu0 %v962
  %1384 = vmatpush1.bf16.msra.mxu0 %v961
  %1385 = vmatprep.subr.bf16.mxu0 %v964
  %1386 = vmatpush1.bf16.msra.mxu0 %v963
  %1387 = vmatprep.subr.bf16.mxu0 %v966
  %1388 = vmatpush1.bf16.msra.mxu0 %v965
  %1389 = vmatprep.subr.bf16.mxu0 %v968
  %1390 = vmatpush1.bf16.msra.mxu0 %v967
  %1391 = vmatprep.subr.bf16.mxu0 %v970
  %1392 = vmatpush1.bf16.msra.mxu0 %v969
  %1393 = vmatprep.subr.bf16.mxu0 %v972
  %1394 = vmatpush1.bf16.msra.mxu0 %v971
  %1395 = vmatprep.subr.bf16.mxu0 %v974
  %1396 = vmatpush1.bf16.msra.mxu0 %v973
  %1397 = vmatprep.subr.bf16.mxu0 %v976
  %1398 = vmatpush1.bf16.msra.mxu0 %v975
  %1399 = vmatprep.subr.bf16.mxu0 %v978
  %1400 = vmatpush1.bf16.msra.mxu0 %v977
  %1401 = vmatprep.subr.bf16.mxu0 %v980
  %1402 = vmatpush1.bf16.msra.mxu0 %v979
  %1403 = vmatprep.mubr.bf16.mxu0 %v265
  %1404 = vmatmul.mubr.bf16.gmra.mrb[0].mxu0 %v264
  %v1405 = vpop.f32.mrb[0].mxu0
  %v1406 = vadd.f32 %v1365, %v1405
  %v1407 = vpop.f32.mrb[0].mxu0
  %v1408 = vadd.f32 %v1367, %v1407
  %v1409 = vpop.f32.mrb[0].mxu0
  %v1410 = vpop.f32.mrb[0].mxu0
  %1411 = vdwg.mxu0
  %1412 = vmatprep.subr.bf16.mxu0 %v982
  %1413 = vmatpush1.bf16.msra.mxu0 %v981
  %1414 = vmatprep.subr.bf16.mxu0 %v984
  %1415 = vmatpush1.bf16.msra.mxu0 %v983
  %1416 = vmatprep.subr.bf16.mxu0 %v986
  %1417 = vmatpush1.bf16.msra.mxu0 %v985
  %1418 = vmatprep.subr.bf16.mxu0 %v988
  %1419 = vmatpush1.bf16.msra.mxu0 %v987
  %1420 = vmatprep.subr.bf16.mxu0 %v990
  %1421 = vmatpush1.bf16.msra.mxu0 %v989
  %1422 = vmatprep.subr.bf16.mxu0 %v992
  %1423 = vmatpush1.bf16.msra.mxu0 %v991
  %1424 = vmatprep.subr.bf16.mxu0 %v994
  %1425 = vmatpush1.bf16.msra.mxu0 %v993
  %1426 = vmatprep.subr.bf16.mxu0 %v996
  %1427 = vmatpush1.bf16.msra.mxu0 %v995
  %1428 = vmatprep.subr.bf16.mxu0 %v998
  %1429 = vmatpush1.bf16.msra.mxu0 %v997
  %1430 = vmatprep.subr.bf16.mxu0 %v1000
  %1431 = vmatpush1.bf16.msra.mxu0 %v999
  %1432 = vmatprep.subr.bf16.mxu0 %v1002
  %1433 = vmatpush1.bf16.msra.mxu0 %v1001
  %1434 = vmatprep.subr.bf16.mxu0 %v1004
  %1435 = vmatpush1.bf16.msra.mxu0 %v1003
  %1436 = vmatprep.subr.bf16.mxu0 %v1006
  %1437 = vmatpush1.bf16.msra.mxu0 %v1005
  %1438 = vmatprep.subr.bf16.mxu0 %v1008
  %1439 = vmatpush1.bf16.msra.mxu0 %v1007
  %1440 = vmatprep.subr.bf16.mxu0 %v1010
  %1441 = vmatpush1.bf16.msra.mxu0 %v1009
  %1442 = vmatprep.subr.bf16.mxu0 %v1012
  %1443 = vmatpush1.bf16.msra.mxu0 %v1011
  %1444 = vmatprep.mubr.bf16.mxu0 %v267
  %1445 = vmatmul.mubr.bf16.gmra.mrb[0].mxu0 %v266
  %v1446 = vpop.f32.mrb[0].mxu0
  %v1447 = vadd.f32 %v1406, %v1446
  %v1448 = vpop.f32.mrb[0].mxu0
  %v1449 = vadd.f32 %v1408, %v1448
  %v1450 = vpop.f32.mrb[0].mxu0
  %v1451 = vpop.f32.mrb[0].mxu0
  %1452 = vdwg.mxu0
  %1453 = vmatprep.subr.bf16.mxu0 %v1014
  %1454 = vmatpush1.bf16.msra.mxu0 %v1013
  %1455 = vmatprep.subr.bf16.mxu0 %v1016
  %1456 = vmatpush1.bf16.msra.mxu0 %v1015
  %1457 = vmatprep.subr.bf16.mxu0 %v1018
  %1458 = vmatpush1.bf16.msra.mxu0 %v1017
  %1459 = vmatprep.subr.bf16.mxu0 %v1020
  %1460 = vmatpush1.bf16.msra.mxu0 %v1019
  %1461 = vmatprep.subr.bf16.mxu0 %v1022
  %1462 = vmatpush1.bf16.msra.mxu0 %v1021
  %1463 = vmatprep.subr.bf16.mxu0 %v1024
  %1464 = vmatpush1.bf16.msra.mxu0 %v1023
  %1465 = vmatprep.subr.bf16.mxu0 %v1026
  %1466 = vmatpush1.bf16.msra.mxu0 %v1025
  %1467 = vmatprep.subr.bf16.mxu0 %v1028
  %1468 = vmatpush1.bf16.msra.mxu0 %v1027
  %1469 = vmatprep.subr.bf16.mxu0 %v1030
  %1470 = vmatpush1.bf16.msra.mxu0 %v1029
  %1471 = vmatprep.subr.bf16.mxu0 %v1032
  %1472 = vmatpush1.bf16.msra.mxu0 %v1031
  %1473 = vmatprep.subr.bf16.mxu0 %v1034
  %1474 = vmatpush1.bf16.msra.mxu0 %v1033
  %1475 = vmatprep.subr.bf16.mxu0 %v1036
  %1476 = vmatpush1.bf16.msra.mxu0 %v1035
  %1477 = vmatprep.subr.bf16.mxu0 %v1038
  %1478 = vmatpush1.bf16.msra.mxu0 %v1037
  %1479 = vmatprep.subr.bf16.mxu0 %v1040
  %1480 = vmatpush1.bf16.msra.mxu0 %v1039
  %1481 = vmatprep.subr.bf16.mxu0 %v1042
  %1482 = vmatpush1.bf16.msra.mxu0 %v1041
  %1483 = vmatprep.subr.bf16.mxu0 %v1044
  %1484 = vmatpush1.bf16.msra.mxu0 %v1043
  %1485 = vmatprep.mubr.bf16.mxu0 %v269
  %1486 = vmatmul.mubr.bf16.gmra.mrb[0].mxu0 %v268
  %v1487 = vpop.f32.mrb[0].mxu0
  %v1488 = vadd.f32 %v1447, %v1487
  %v1489 = vpop.f32.mrb[0].mxu0
  %v1490 = vadd.f32 %v1449, %v1489
  %v1491 = vpop.f32.mrb[0].mxu0
  %v1492 = vpop.f32.mrb[0].mxu0
  %1493 = vdwg.mxu0
  %1494 = vmatprep.subr.bf16.mxu0 %v1046
  %1495 = vmatpush1.bf16.msra.mxu0 %v1045
  %1496 = vmatprep.subr.bf16.mxu0 %v1048
  %1497 = vmatpush1.bf16.msra.mxu0 %v1047
  %1498 = vmatprep.subr.bf16.mxu0 %v1050
  %1499 = vmatpush1.bf16.msra.mxu0 %v1049
  %1500 = vmatprep.subr.bf16.mxu0 %v1052
  %1501 = vmatpush1.bf16.msra.mxu0 %v1051
  %1502 = vmatprep.subr.bf16.mxu0 %v1054
  %1503 = vmatpush1.bf16.msra.mxu0 %v1053
  %1504 = vmatprep.subr.bf16.mxu0 %v1056
  %1505 = vmatpush1.bf16.msra.mxu0 %v1055
  %1506 = vmatprep.subr.bf16.mxu0 %v1058
  %1507 = vmatpush1.bf16.msra.mxu0 %v1057
  %1508 = vmatprep.subr.bf16.mxu0 %v1060
  %1509 = vmatpush1.bf16.msra.mxu0 %v1059
  %1510 = vmatprep.subr.bf16.mxu0 %v1062
  %1511 = vmatpush1.bf16.msra.mxu0 %v1061
  %1512 = vmatprep.subr.bf16.mxu0 %v1064
  %1513 = vmatpush1.bf16.msra.mxu0 %v1063
  %1514 = vmatprep.subr.bf16.mxu0 %v1066
  %1515 = vmatpush1.bf16.msra.mxu0 %v1065
  %1516 = vmatprep.subr.bf16.mxu0 %v1068
  %1517 = vmatpush1.bf16.msra.mxu0 %v1067
  %1518 = vmatprep.subr.bf16.mxu0 %v1070
  %1519 = vmatpush1.bf16.msra.mxu0 %v1069
  %1520 = vmatprep.subr.bf16.mxu0 %v1072
  %1521 = vmatpush1.bf16.msra.mxu0 %v1071
  %1522 = vmatprep.subr.bf16.mxu0 %v1074
  %1523 = vmatpush1.bf16.msra.mxu0 %v1073
  %1524 = vmatprep.subr.bf16.mxu0 %v1076
  %1525 = vmatpush1.bf16.msra.mxu0 %v1075
  %1526 = vmatprep.mubr.bf16.mxu0 %v271
  %1527 = vmatmul.mubr.bf16.gmra.mrb[0].mxu0 %v270
  %v1528 = vpop.f32.mrb[0].mxu0
  %v1529 = vadd.f32 %v1488, %v1528
  %v1530 = vpop.f32.mrb[0].mxu0
  %v1531 = vadd.f32 %v1490, %v1530
  %v1532 = vpop.f32.mrb[0].mxu0
  %v1533 = vpop.f32.mrb[0].mxu0
  %1534 = vdwg.mxu0
  %1535 = vmatprep.subr.bf16.mxu0 %v1078
  %1536 = vmatpush1.bf16.msra.mxu0 %v1077
  %1537 = vmatprep.subr.bf16.mxu0 %v1080
  %1538 = vmatpush1.bf16.msra.mxu0 %v1079
  %1539 = vmatprep.subr.bf16.mxu0 %v1082
  %1540 = vmatpush1.bf16.msra.mxu0 %v1081
  %1541 = vmatprep.subr.bf16.mxu0 %v1084
  %1542 = vmatpush1.bf16.msra.mxu0 %v1083
  %1543 = vmatprep.subr.bf16.mxu0 0
  %1544 = vmatpush1.bf16.msra.mxu0 0
  %1545 = vmatprep.subr.bf16.mxu0 0
  %1546 = vmatpush1.bf16.msra.mxu0 0
  %1547 = vmatprep.subr.bf16.mxu0 0
  %1548 = vmatpush1.bf16.msra.mxu0 0
  %1549 = vmatprep.subr.bf16.mxu0 0
  %1550 = vmatpush1.bf16.msra.mxu0 0
  %1551 = vmatprep.subr.bf16.mxu0 0
  %1552 = vmatpush1.bf16.msra.mxu0 0
  %1553 = vmatprep.subr.bf16.mxu0 0
  %1554 = vmatpush1.bf16.msra.mxu0 0
  %1555 = vmatprep.subr.bf16.mxu0 0
  %1556 = vmatpush1.bf16.msra.mxu0 0
  %1557 = vmatprep.subr.bf16.mxu0 0
  %1558 = vmatpush1.bf16.msra.mxu0 0
  %1559 = vmatprep.subr.bf16.mxu0 0
  %1560 = vmatpush1.bf16.msra.mxu0 0
  %1561 = vmatprep.subr.bf16.mxu0 0
  %1562 = vmatpush1.bf16.msra.mxu0 0
  %1563 = vmatprep.subr.bf16.mxu0 0
  %1564 = vmatpush1.bf16.msra.mxu0 0
  %1565 = vmatprep.subr.bf16.mxu0 0
  %1566 = vmatpush1.bf16.msra.mxu0 0
  %1567 = vmatprep.mubr.bf16.mxu0 0
  %1568 = vmatmul.mubr.bf16.gmra.mrb[0].mxu0 %v1287
  %v1569 = vpop.f32.mrb[0].mxu0
  %v1570 = vadd.f32 %v1529, %v1569
  %v1571 = vpop.f32.mrb[0].mxu0
  %v1572 = vadd.f32 %v1531, %v1571
  %v1573 = vpop.f32.mrb[0].mxu0
  %v1574 = vpop.f32.mrb[0].mxu0
  %1575 = vdwg.mxu0
  %v1576 = vpack.c.bf16 %v1570, %v1570
  %v1577 = vpack.c.bf16 %v1572, %v1572
  %v1578 = vld [vmem:[%s3] sm:$0xf]
  %v1579 = vld [vmem:[%s3 + $0x4] sm:$0xf]
  %v1580 = vld [vmem:[%s3 + $0x8] sm:$0xf]
  %v1581 = vld [vmem:[%s3 + $0xc] sm:$0xf]
  %v1582 = vld [vmem:[%s3 + $0x10] sm:$0xf]
  %v1583 = vld [vmem:[%s3 + $0x14] sm:$0xf]
  %v1584 = vld [vmem:[%s3 + $0x18] sm:$0xf]
  %v1585 = vld [vmem:[%s3 + $0x1c] sm:$0xf]
  %v1586 = vld [vmem:[%s3 + $0x20] sm:$0xf]
  %v1587 = vld [vmem:[%s3 + $0x24] sm:$0xf]
  %v1588 = vld [vmem:[%s3 + $0x28] sm:$0xf]
  %v1589 = vld [vmem:[%s3 + $0x2c] sm:$0xf]
  %v1590 = vld [vmem:[%s3 + $0x30] sm:$0xf]
  %v1591 = vld [vmem:[%s3 + $0x34] sm:$0xf]
  %v1592 = vld [vmem:[%s3 + $0x38] sm:$0xf]
  %v1593 = vld [vmem:[%s3 + $0x3c] sm:$0xf]
  %v1594 = vld [vmem:[%s3 + $0x40] sm:$0xf]
  %v1595 = vld [vmem:[%s3 + $0x44] sm:$0xf]
  %v1596 = vld [vmem:[%s3 + $0x48] sm:$0xf]
  %v1597 = vld [vmem:[%s3 + $0x4c] sm:$0xf]
  %v1598 = vld [vmem:[%s3 + $0x50] sm:$0xf]
  %v1599 = vld [vmem:[%s3 + $0x54] sm:$0xf]
  %v1600 = vld [vmem:[%s3 + $0x58] sm:$0xf]
  %v1601 = vld [vmem:[%s3 + $0x5c] sm:$0xf]
  %v1602 = vld [vmem:[%s3 + $0x60] sm:$0xf]
  %v1603 = vld [vmem:[%s3 + $0x64] sm:$0xf]
  %v1604 = vld [vmem:[%s3 + $0x68] sm:$0xf]
  %v1605 = vld [vmem:[%s3 + $0x6c] sm:$0xf]
  %v1606 = vld [vmem:[%s3 + $0x70] sm:$0xf]
  %v1607 = vld [vmem:[%s3 + $0x74] sm:$0xf]
  %v1608 = vld [vmem:[%s3 + $0x78] sm:$0xf]
  %v1609 = vld [vmem:[%s3 + $0x7c] sm:$0xf]
  %v1610 = vld [vmem:[%s4] sm:$0x1]
  %v1612 = vlaneseq
  %v1613 = vshrl.u32 %v1612, 7
  %v1614 = vsub.s32 0, %v1613
  %v1615 = vrot.slane %v1610, %v1614
  %v1649 = vunpack.c.l.b16 %v1578
  %v1650 = vunpack.c.l.b16 %v1579
  %v1651 = vunpack.c.l.b16 %v1580
  %v1652 = vunpack.c.l.b16 %v1581
  %v1653 = vunpack.c.l.b16 %v1582
  %v1654 = vunpack.c.l.b16 %v1583
  %v1655 = vunpack.c.l.b16 %v1584
  %v1656 = vunpack.c.l.b16 %v1585
  %v1657 = vunpack.c.l.b16 %v1586
  %v1658 = vunpack.c.l.b16 %v1587
  %v1659 = vunpack.c.l.b16 %v1588
  %v1660 = vunpack.c.l.b16 %v1589
  %v1661 = vunpack.c.l.b16 %v1590
  %v1662 = vunpack.c.l.b16 %v1591
  %v1663 = vunpack.c.l.b16 %v1592
  %v1664 = vunpack.c.l.b16 %v1593
  %v1665 = vunpack.c.l.b16 %v1594
  %v1666 = vunpack.c.l.b16 %v1595
  %v1667 = vunpack.c.l.b16 %v1596
  %v1668 = vunpack.c.l.b16 %v1597
  %v1669 = vunpack.c.l.b16 %v1598
  %v1670 = vunpack.c.l.b16 %v1599
  %v1671 = vunpack.c.l.b16 %v1600
  %v1672 = vunpack.c.l.b16 %v1601
  %v1673 = vunpack.c.l.b16 %v1602
  %v1674 = vunpack.c.l.b16 %v1603
  %v1675 = vunpack.c.l.b16 %v1604
  %v1676 = vunpack.c.l.b16 %v1605
  %v1677 = vunpack.c.l.b16 %v1606
  %v1678 = vunpack.c.l.b16 %v1607
  %v1679 = vunpack.c.l.b16 %v1608
  %v1680 = vunpack.c.l.b16 %v1609
  %v1681 = vpack.c.b16 %v1650, %v1649
  %v1682 = vpack.c.b16 %v1652, %v1651
  %v1683 = vpack.c.b16 %v1654, %v1653
  %v1684 = vpack.c.b16 %v1656, %v1655
  %v1685 = vpack.c.b16 %v1658, %v1657
  %v1686 = vpack.c.b16 %v1660, %v1659
  %v1687 = vpack.c.b16 %v1662, %v1661
  %v1688 = vpack.c.b16 %v1664, %v1663
  %v1689 = vpack.c.b16 %v1666, %v1665
  %v1690 = vpack.c.b16 %v1668, %v1667
  %v1691 = vpack.c.b16 %v1670, %v1669
  %v1692 = vpack.c.b16 %v1672, %v1671
  %v1693 = vpack.c.b16 %v1674, %v1673
  %v1694 = vpack.c.b16 %v1676, %v1675
  %v1695 = vpack.c.b16 %v1678, %v1677
  %v1696 = vpack.c.b16 %v1680, %v1679
  %1713 = vmatprep.subr.bf16.mxu0 0
  %1714 = vmatpush1.bf16.msra.mxu0 %v1681
  %1715 = vmatprep.subr.bf16.mxu0 0
  %1716 = vmatpush1.bf16.msra.mxu0 %v1682
  %1717 = vmatprep.subr.bf16.mxu0 0
  %1718 = vmatpush1.bf16.msra.mxu0 %v1683
  %1719 = vmatprep.subr.bf16.mxu0 0
  %1720 = vmatpush1.bf16.msra.mxu0 %v1684
  %1721 = vmatprep.subr.bf16.mxu0 0
  %1722 = vmatpush1.bf16.msra.mxu0 %v1685
  %1723 = vmatprep.subr.bf16.mxu0 0
  %1724 = vmatpush1.bf16.msra.mxu0 %v1686
  %1725 = vmatprep.subr.bf16.mxu0 0
  %1726 = vmatpush1.bf16.msra.mxu0 %v1687
  %1727 = vmatprep.subr.bf16.mxu0 0
  %1728 = vmatpush1.bf16.msra.mxu0 %v1688
  %1729 = vmatprep.subr.bf16.mxu0 0
  %1730 = vmatpush1.bf16.msra.mxu0 %v1689
  %1731 = vmatprep.subr.bf16.mxu0 0
  %1732 = vmatpush1.bf16.msra.mxu0 %v1690
  %1733 = vmatprep.subr.bf16.mxu0 0
  %1734 = vmatpush1.bf16.msra.mxu0 %v1691
  %1735 = vmatprep.subr.bf16.mxu0 0
  %1736 = vmatpush1.bf16.msra.mxu0 %v1692
  %1737 = vmatprep.subr.bf16.mxu0 0
  %1738 = vmatpush1.bf16.msra.mxu0 %v1693
  %1739 = vmatprep.subr.bf16.mxu0 0
  %1740 = vmatpush1.bf16.msra.mxu0 %v1694
  %1741 = vmatprep.subr.bf16.mxu0 0
  %1742 = vmatpush1.bf16.msra.mxu0 %v1695
  %1743 = vmatprep.subr.bf16.mxu0 0
  %1744 = vmatpush1.bf16.msra.mxu0 %v1696
  %1745 = vmatprep.mubr.bf16.mxu0 %v1577
  %1746 = vmatmul.mubr.bf16.gmra.mrb[0].mxu0 %v1576
  %v1747 = vpop.f32.mrb[0].mxu0
  %v1748 = vadd.f32 %v1615, %v1747
  %v1749 = vpop.f32.mrb[0].mxu0
  %v1750 = vpop.f32.mrb[0].mxu0
  %v1751 = vpop.f32.mrb[0].mxu0
  %1752 = vdwg.mxu0
  %v1753 = vlaneseq
  %v1754 = vand.u32 %v1753, 127
  %vm1755 = vcmp.lt.s32.totalorder %v1754, 10
  %v1756 = vsel %vm1755, %v1748, -1e+30
  %1757 = vmax.xlane.f32.xlu0 %v1756
  %v1758 = vpop.xlane.xlu0 %1757
  %v1759 = vsub.f32 %v1756, %v1758
  %v1760 = vmul.f32 %v1759, 1.442695
  %v1761 = vpow.pop %v1760
  %1762 = vadd.xlane.f32.xlu0 %v1761
  %v1763 = vpop.xlane.xlu0 %1762
  %v1764 = vrcp.pop %v1763
  %v1765 = vmul.f32 %v1761, %v1764
  %1766 = vst [vmem:[%s5] sm:$0xff] %v1765
  // Predicated region
  $region22: #{net_forward.1} parent=0 // pred_check
    _
  $region23: #{net_forward.1} parent=0 // pred_check_branch
    %1768 = sbr.rel (0) target = $region25
  $region24: #{net_forward.1} parent=0 // pred_region
    _
  $region25: #{net_forward.1} parent=0 // pred_fallthru
    _
  // Predicated region
  $region26: #{net_forward.1} parent=0 // pred_check
    _
  $region27: #{net_forward.1} parent=0 // pred_check_branch
    %1770 = sbr.rel (0) target = $region29
  $region28: #{net_forward.1} parent=0 // pred_region
    _
  $region29: #{net_forward.1} parent=0 // pred_fallthru
    _

</llo_original>
